<compile_context>
chip_gen: v7x
topology: tpu7x:2x2x1
jax: 0.10.0
libtpu: 0.0.40
codegen_flags: <defaults>
</compile_context>

<pallas_src>
import functools

import jax
import jax.numpy as jnp
from jax.experimental import pallas as pl
from jax.experimental.pallas import tpu as pltpu

_LN_EPS = 1e-12


def _round_up(v, m):
    return (v + m - 1) // m * m


def _tpu_vmem_capacity():
    try:
        return int(pltpu.get_tpu_info().vmem_capacity_bytes)
    except Exception:
        return 64 << 20  # conservative fallback (v7x per-TC size)


def _ln_rows(y, gamma, beta, c_out, pad_c):
    """Row-wise LayerNorm over the first c_out columns of y (f32).

    Padded columns of y are exactly 0 (zero W columns / zero bias), so the
    plain row sum already gives the correct mean, and the variance sum over
    real columns equals sum(centered^2) - pad_c * mean^2 exactly (in the
    padded columns centered == -mean).  No full-tile mask needed.
    """
    inv_c = 1.0 / float(c_out)
    mean = jnp.sum(y, axis=-1, keepdims=True) * inv_c
    centered = y - mean
    sq_sum = jnp.sum(centered * centered, axis=-1, keepdims=True)
    if pad_c:
        sq_sum = sq_sum - float(pad_c) * (mean * mean)
    inv_std = jax.lax.rsqrt(sq_sum * inv_c + _LN_EPS)
    return centered * (inv_std * gamma) + beta


def _feature_resizer_kernel(x_ref, w_ref, p_ref, o_ref, *, c_out, pad_c):
    # x_ref: (TN, C_in); w_ref: (C_in, C_out_pad); p_ref: (3, C_out_pad)
    # rows of p = [bias, gamma, beta]; o_ref: (TN, C_out_pad)
    p = p_ref[...].astype(jnp.float32)
    y = jnp.dot(x_ref[...], w_ref[...],
                preferred_element_type=jnp.float32) + p[0:1, :]
    # Rows of a partial last grid block see padded/garbage input, which is
    # harmless: LN is per-row and those rows are masked on store.
    o_ref[...] = _ln_rows(y, p[1:2, :], p[2:3, :], c_out, pad_c).astype(o_ref.dtype)


def _feature_resizer_kernel_ksplit(x_ref, w_ref, p_ref, o_ref, acc_ref, *,
                                   c_out, pad_c):
    # Weight-streaming path: grid = (row tiles, K tiles), reduction axis last.
    k = pl.program_id(1)

    @pl.when(k == 0)
    def _():
        acc_ref[...] = jnp.zeros_like(acc_ref)

    acc_ref[...] += jnp.dot(x_ref[...], w_ref[...],
                            preferred_element_type=jnp.float32)

    @pl.when(k == pl.num_programs(1) - 1)
    def _():
        p = p_ref[...].astype(jnp.float32)
        y = acc_ref[...] + p[0:1, :]
        o_ref[...] = _ln_rows(y, p[1:2, :], p[2:3, :],
                              c_out, pad_c).astype(o_ref.dtype)


def prepare_feature_resizer_params(w, b, gamma, beta):
    """One-time (init) packing / padding of the Linear + LayerNorm parameters.

    Hoisted out of the per-call path so a forward pass never re-materializes a
    padded copy of W in HBM.
    """
    _, c_out = w.shape
    pad_c = _round_up(c_out, 128) - c_out
    # Lane-dense (multiple-of-128) output only when the relative pad is small;
    # heavy padding (e.g. 64 -> 128) would add more HBM write traffic than the
    # masked-store penalty it saves on this mem-bound op.
    if pad_c and 4 * pad_c > c_out:
        pad_c = 0

    w_p = jnp.pad(w, ((0, 0), (0, pad_c))) if pad_c else w
    params = jnp.stack([
        jnp.pad(b.astype(jnp.float32), (0, pad_c)),
        jnp.pad(gamma.astype(jnp.float32), (0, pad_c)),
        jnp.pad(beta.astype(jnp.float32), (0, pad_c)),
    ])  # (3, c_out_pad): one resident buffer / one DMA instead of three.
    return {"w": w_p, "params": params, "c_out": c_out, "pad_c": pad_c}


def feature_resizer_apply(x, prepared, *, tile_n=512):
    """FeatureResizer forward: LayerNorm(x @ W + b) over the last axis."""
    w_p = prepared["w"]
    params = prepared["params"]
    c_out = prepared["c_out"]
    pad_c = prepared["pad_c"]

    *lead, c_in = x.shape
    c_out_pad = w_p.shape[1]
    n = 1
    for d in lead:
        n *= d
    x2 = x.reshape(n, c_in)

    out_dtype = x.dtype
    x_isz = jnp.dtype(x.dtype).itemsize
    w_isz = jnp.dtype(w_p.dtype).itemsize
    out_isz = jnp.dtype(out_dtype).itemsize
    # Sublane pack of the output dtype: 8 rows for 4-byte, 16 for 2-byte, ...
    pack = max(8, 32 // out_isz)

    vmem_cap = _tpu_vmem_capacity()
    small_vmem = vmem_cap < (100 << 20)       # v7x-like (64 MiB per TC)
    vmem_budget = int(vmem_cap * 0.6)          # ~76 MiB v5e/v6e, ~38 MiB v7x

    # Row tile: large (op is HBM-bandwidth bound), sublane-pack aligned,
    # clamped to the row count and to the VMEM budget below.
    tile_n = max(pack, _round_up(min(tile_n, n), pack))
    if small_vmem:
        # v7x has 2 TensorCores: keep >= 2 balanced row blocks so the
        # "parallel" grid axis can shard across both cores.
        tile_n = min(tile_n, max(pack, _round_up(pl.cdiv(n, 2), pack)))

    weight_bytes = c_in * c_out_pad * w_isz
    use_ksplit = small_vmem and weight_bytes > (24 << 20) and c_in % 128 == 0

    if not use_ksplit:
        def vmem_estimate(tn):
            return (2 * tn * c_in * x_isz            # double-buffered x tiles
                    + 2 * tn * c_out_pad * out_isz   # double-buffered out tiles
                    + weight_bytes                   # single-buffered weight
                    + 3 * c_out_pad * 4              # single-buffered params
                    + 2 * tn * c_out_pad * 4)        # in-kernel f32 temps (y, centered)

        while tile_n > pack and vmem_estimate(tile_n) > vmem_budget:
            tile_n = max(pack, _round_up(tile_n // 2, pack))
        vmem_limit = int(min(max(vmem_estimate(tile_n) * 5 // 4, 32 << 20),
                             vmem_cap * 7 // 8))

        kernel = functools.partial(_feature_resizer_kernel,
                                   c_out=c_out, pad_c=pad_c)
        out2 = pl.pallas_call(
            kernel,
            out_shape=jax.ShapeDtypeStruct((n, c_out_pad), out_dtype),
            grid_spec=pltpu.PrefetchScalarGridSpec(
                num_scalar_prefetch=0,
                grid=(pl.cdiv(n, tile_n),),
                in_specs=[
                    pl.BlockSpec((tile_n, c_in), lambda i: (i, 0)),
                    # Constant index_map across the grid -> single-buffer to
                    # avoid a wasted second weight/param copy in VMEM.
                    pl.BlockSpec((c_in, c_out_pad), lambda i: (0, 0),
                                 pipeline_mode=pl.Buffered(1)),
                    pl.BlockSpec((3, c_out_pad), lambda i: (0, 0),
                                 pipeline_mode=pl.Buffered(1)),
                ],
                out_specs=pl.BlockSpec((tile_n, c_out_pad), lambda i: (i, 0)),
            ),
            compiler_params=pltpu.CompilerParams(
                dimension_semantics=("parallel",),
                vmem_limit_bytes=vmem_limit,
            ),
        )(x2, w_p, params)
    else:
        # Weight-streaming fallback (v7x, huge W): tile C_in, accumulate in
        # an f32 VMEM scratch, LN only on the last K step.
        tk = 128
        for cand in (1024, 512, 256, 128):
            if cand <= c_in and c_in % cand == 0:
                tk = cand
                break

        def vmem_estimate(tn):
            return (2 * tn * tk * x_isz              # double-buffered x K-tiles
                    + 2 * tk * c_out_pad * w_isz     # double-buffered W K-tiles
                    + 2 * tn * c_out_pad * out_isz   # double-buffered out tiles
                    + tn * c_out_pad * 4             # f32 accumulator scratch
                    + 3 * c_out_pad * 4              # params
                    + 2 * tn * c_out_pad * 4)        # epilogue f32 temps

        while tile_n > pack and vmem_estimate(tile_n) > vmem_budget:
            tile_n = max(pack, _round_up(tile_n // 2, pack))
        vmem_limit = int(min(max(vmem_estimate(tile_n) * 5 // 4, 32 << 20),
                             vmem_cap * 7 // 8))

        kernel = functools.partial(_feature_resizer_kernel_ksplit,
                                   c_out=c_out, pad_c=pad_c)
        out2 = pl.pallas_call(
            kernel,
            out_shape=jax.ShapeDtypeStruct((n, c_out_pad), out_dtype),
            grid_spec=pltpu.PrefetchScalarGridSpec(
                num_scalar_prefetch=0,
                grid=(pl.cdiv(n, tile_n), c_in // tk),
                in_specs=[
                    pl.BlockSpec((tile_n, tk), lambda i, k: (i, k)),
                    pl.BlockSpec((tk, c_out_pad), lambda i, k: (k, 0)),
                    pl.BlockSpec((3, c_out_pad), lambda i, k: (0, 0),
                                 pipeline_mode=pl.Buffered(1)),
                ],
                out_specs=pl.BlockSpec((tile_n, c_out_pad), lambda i, k: (i, 0)),
                scratch_shapes=[pltpu.VMEM((tile_n, c_out_pad), jnp.float32)],
            ),
            compiler_params=pltpu.CompilerParams(
                dimension_semantics=("parallel", "arbitrary"),
                vmem_limit_bytes=vmem_limit,
            ),
        )(x2, w_p, params)

    out2 = out2[:, :c_out] if pad_c else out2
    return out2.reshape(*lead, c_out)


def feature_resizer(x, w, b, gamma, beta, *, tile_n=512):
    """Convenience wrapper. For repeated forward passes, call
    prepare_feature_resizer_params() once and reuse the result."""
    prepared = prepare_feature_resizer_params(w, b, gamma, beta)
    return feature_resizer_apply(x, prepared, tile_n=tile_n)


def _reference(x, w, b, gamma, beta):
    y = jnp.einsum("...c,cd->...d", x.astype(jnp.float32),
                   w.astype(jnp.float32)) + b
    mean = jnp.mean(y, axis=-1, keepdims=True)
    var = jnp.mean((y - mean) ** 2, axis=-1, keepdims=True)
    return ((y - mean) / jnp.sqrt(var + _LN_EPS)) * gamma + beta


if __name__ == "__main__":
    key = jax.random.PRNGKey(0)
    B, S = 2, 8
    C_in, C_out = 32, 64  # input_feat_size, output_feat_size

    k_x, k_w, k_b = jax.random.split(key, 3)
    x = jax.random.normal(k_x, (B, S, C_in), dtype=jnp.float32)

    # Deterministic parameter init (synthetic; shapes match nn.Linear / nn.LayerNorm).
    bound = 1.0 / (C_in ** 0.5)
    w = jax.random.uniform(k_w, (C_in, C_out), minval=-bound, maxval=bound,
                           dtype=jnp.float32)
    b = jax.random.uniform(k_b, (C_out,), minval=-bound, maxval=bound,
                           dtype=jnp.float32)
    gamma = jnp.ones((C_out,), dtype=jnp.float32)   # LayerNorm weight init
    beta = jnp.zeros((C_out,), dtype=jnp.float32)   # LayerNorm bias init

    # Prep once (init-time), then apply (per forward pass).
    prepared = prepare_feature_resizer_params(w, b, gamma, beta)
    out = feature_resizer_apply(x, prepared)
    out = jax.block_until_ready(out)

    ref = _reference(x, w, b, gamma, beta)
    assert out.shape == (B, S, C_out)
    assert jnp.allclose(out, ref, atol=1e-5, rtol=1e-5), "mismatch vs reference"

    print("KERNEL_OK")
</pallas_src>

<mosaic_0001>
module attributes {stable_mosaic.version = 11 : i64} {
  func.func @_feature_resizer_kernel(%arg0: i32, %arg1: memref<8x32xf32, #tpu.memory_space<vmem>>, %arg2: memref<32x64xf32, #tpu.memory_space<vmem>>, %arg3: memref<3x64xf32, #tpu.memory_space<vmem>>, %arg4: memref<8x64xf32, #tpu.memory_space<vmem>>) attributes {dimension_semantics = [#tpu.dimension_semantics<parallel>], iteration_bounds = array<i64: 2>, scalar_prefetch = 0 : i64, scratch_operands = 0 : i64, tpu.core_type = #tpu.core_type<tc>, window_params = [{transform_indices = @transform_0, window_bounds = array<i64: 8, 32>}, {pipeline_mode = #tpu.pipeline_mode<synchronous>, transform_indices = @transform_1, window_bounds = array<i64: 32, 64>}, {pipeline_mode = #tpu.pipeline_mode<synchronous>, transform_indices = @transform_2, window_bounds = array<i64: 3, 64>}, {transform_indices = @transform_3, window_bounds = array<i64: 8, 64>}]} {
    %c0 = arith.constant 0 : index
    %c0_0 = arith.constant 0 : index
    %0 = vector.load %arg3[%c0, %c0_0] : memref<3x64xf32, #tpu.memory_space<vmem>>, vector<3x64xf32>
    %c0_1 = arith.constant 0 : index
    %c0_2 = arith.constant 0 : index
    %1 = vector.load %arg1[%c0_1, %c0_2] : memref<8x32xf32, #tpu.memory_space<vmem>>, vector<8x32xf32>
    %c0_3 = arith.constant 0 : index
    %c0_4 = arith.constant 0 : index
    %2 = vector.load %arg2[%c0_3, %c0_4] : memref<32x64xf32, #tpu.memory_space<vmem>>, vector<32x64xf32>
    %cst = arith.constant dense<0.000000e+00> : vector<8x64xf32>
    %3 = tpu.matmul %1, %2, %cst {dimension_numbers = #tpu.dot_dimension_numbers<[1], [0], [0], [1], [0, 0, 1, 1], [], []>} : vector<8x32xf32>, vector<32x64xf32>, vector<8x64xf32> -> vector<8x64xf32>
    %4 = vector.extract_strided_slice %0 {offsets = [0, 0], sizes = [1, 64], strides = [1, 1]} : vector<3x64xf32> to vector<1x64xf32>
    %5 = vector.broadcast %4 : vector<1x64xf32> to vector<8x64xf32>
    %6 = arith.addf %3, %5 : vector<8x64xf32>
    %7 = vector.extract_strided_slice %0 {offsets = [1, 0], sizes = [1, 64], strides = [1, 1]} : vector<3x64xf32> to vector<1x64xf32>
    %8 = vector.extract_strided_slice %0 {offsets = [2, 0], sizes = [1, 64], strides = [1, 1]} : vector<3x64xf32> to vector<1x64xf32>
    %cst_5 = arith.constant dense<0.000000e+00> : vector<8xf32>
    %9 = vector.multi_reduction <add>, %6, %cst_5 [1] : vector<8x64xf32> to vector<8xf32>
    %10 = vector.shape_cast %9 : vector<8xf32> to vector<8x1xf32>
    %cst_6 = arith.constant 1.562500e-02 : f32
    %11 = vector.broadcast %cst_6 : f32 to vector<8x1xf32>
    %12 = arith.mulf %10, %11 : vector<8x1xf32>
    %13 = vector.broadcast %12 : vector<8x1xf32> to vector<8x64xf32>
    %14 = arith.subf %6, %13 : vector<8x64xf32>
    %15 = arith.mulf %14, %14 : vector<8x64xf32>
    %cst_7 = arith.constant dense<0.000000e+00> : vector<8xf32>
    %16 = vector.multi_reduction <add>, %15, %cst_7 [1] : vector<8x64xf32> to vector<8xf32>
    %17 = vector.shape_cast %16 : vector<8xf32> to vector<8x1xf32>
    %cst_8 = arith.constant 1.562500e-02 : f32
    %18 = vector.broadcast %cst_8 : f32 to vector<8x1xf32>
    %19 = arith.mulf %17, %18 : vector<8x1xf32>
    %cst_9 = arith.constant 9.99999996E-13 : f32
    %20 = vector.broadcast %cst_9 : f32 to vector<8x1xf32>
    %21 = arith.addf %19, %20 : vector<8x1xf32>
    %22 = math.rsqrt %21 : vector<8x1xf32>
    %23 = vector.broadcast %22 : vector<8x1xf32> to vector<8x64xf32>
    %24 = vector.broadcast %7 : vector<1x64xf32> to vector<8x64xf32>
    %25 = arith.mulf %23, %24 : vector<8x64xf32>
    %26 = arith.mulf %14, %25 : vector<8x64xf32>
    %27 = vector.broadcast %8 : vector<1x64xf32> to vector<8x64xf32>
    %28 = arith.addf %26, %27 : vector<8x64xf32>
    %c0_10 = arith.constant 0 : index
    %c0_11 = arith.constant 0 : index
    %29 = vector.load %arg4[%c0_10, %c0_11] : memref<8x64xf32, #tpu.memory_space<vmem>>, vector<8x64xf32>
    tpu.vector_store %arg4[%c0_10, %c0_11], %28 {strides = array<i32>} : memref<8x64xf32, #tpu.memory_space<vmem>>, vector<8x64xf32>,
    return
  }
  func.func @transform_0(%arg0: i32) -> (i32, i32) {
    %c0_i32 = arith.constant 0 : i32
    %c0_i32_0 = arith.constant 0 : i32
    return %arg0, %c0_i32 : i32, i32
  }
  func.func @transform_1(%arg0: i32) -> (i32, i32) {
    %c0_i32 = arith.constant 0 : i32
    %c0_i32_0 = arith.constant 0 : i32
    %c0_i32_1 = arith.constant 0 : i32
    return %c0_i32, %c0_i32_0 : i32, i32
  }
  func.func @transform_2(%arg0: i32) -> (i32, i32) {
    %c0_i32 = arith.constant 0 : i32
    %c0_i32_0 = arith.constant 0 : i32
    %c0_i32_1 = arith.constant 0 : i32
    return %c0_i32, %c0_i32_0 : i32, i32
  }
  func.func @transform_3(%arg0: i32) -> (i32, i32) {
    %c0_i32 = arith.constant 0 : i32
    %c0_i32_0 = arith.constant 0 : i32
    return %arg0, %c0_i32 : i32, i32
  }
}

</mosaic_0001>

<llo_original>
// kernel: tpu_custom_call.1
$region0: #{tpu_custom_call.1}
  #allocation0 [shape = 'u32[]', space=smem, size = 0x4, offset = 0x4, fixed_abs, tag = 'smem constant byte address 0x4 - core index']
  #allocation1 [shape = 'u32[144,128]{1,0:T(1,128)}', space=vmem, size = 0x12000, scoped, tag = 'internal scratch']
  %s0 = inlined_call_operand.hbm [shape: f32[16,32], index: 0, kind: input, shape index: {}]
  %s1 = inlined_call_operand.hbm [shape: f32[32,64], index: 1, kind: input, shape index: {}]
  %s2 = inlined_call_operand.vmem [shape: f32[3,64], index: 2, kind: input, shape index: {}]
  %s3 = inlined_call_operand.hbm [shape: f32[16,64], index: 3, kind: output, shape index: {}]
  %s4 = sld [smem:[#allocation0]]
  $region53: #{tpu_custom_call.1} parent=0
    _
  %s6 = ssub.s32 1, %s4
  %s7 = scalar_select 0, %s6, %s4
  $region1: #{tpu_custom_call.1} parent=0
    #allocation2 [shape = 'u8[8192]{0}', space=vmem, size = 0x2000, scoped, tag = 'input window, operand 0']
    #allocation3 [shape = 's32[2]{0}', space=sflag, size = 0x8, scoped, tag = 'scoped memory for tpu_custom_call.1']
    #allocation4 [shape = 's32[2]{0}', space=sflag, size = 0x8, scoped, tag = 'scoped memory for tpu_custom_call.1']
    #allocation5 [shape = 'u8[16384]{0}', space=vmem, size = 0x4000, scoped, tag = 'input window, operand 1, single buffered']
    #allocation6 [shape = 's32[1]{0}', space=sflag, size = 0x4, scoped, tag = 'scoped memory for tpu_custom_call.1']
    #allocation7 [shape = 'u8[8192]{0}', space=vmem, size = 0x2000, scoped, tag = 'output window, operand 0']
    %8 = vsyncpa [#allocation3], 0
    %s9 = scalar_lea.sflag [#allocation3], 1
    %10 = vsyncpa %s9, 0
    %11 = vsyncpa [#allocation6], 0
    %12 = vsyncpa [#allocation4], 0
    %s13 = scalar_lea.sflag [#allocation4], 1
    %14 = vsyncpa %s13, 0
    loop: start=0, step=1, limit=4
    $region2: #{tpu_custom_call.1} parent=1 // loop_pre_header
      _
    $region3: #{tpu_custom_call.1} parent=1 // loop_header
      %s16 = sphi 0, %s20
      %p17 = scmp.ge.s32.totalorder %s16, 4
      %s26 = sphi 0, %s28
      %s29 = sphi 0, %s26
      %s30 = sphi 0, %s29
      %s46 = sphi 0, %s30
      %s50 = sphi 0, %s50
      %s52 = sphi 0, %s50
      %s53 = sphi 0, %s52
      %s67 = sphi 0, %s53
      %s71 = sphi 0, %s71
      %s73 = sphi 0, %s71
      %s74 = sphi 0, %s73
      %s88 = sphi 0, %s74
      %s94 = sphi 0, %s96
      %s97 = sphi 0, %s94
      %s98 = sphi 0, %s97
      %s114 = sphi 0, %s98
    $region4: #{tpu_custom_call.1} parent=1 // loop_header_branch
      %19 = sbr.rel (%p17) target = $region8
    $region5: #{tpu_custom_call.1} parent=1 // loop_body
      %s21 = ssub.s32 %s16, 1
      %s22 = ssub.s32 %s16, 2
      %s23 = sadd.s32 %s16, 1
      %s24 = ssub.s32 %s16, %s23
      %p25 = scmp.eq.s32.totalorder %s24, 0
      %s27 = sadd.s32 %s26, 1
      %s28 = scalar_select %p25, %s26, %s27
      %p31 = pneg %p25
      %p32 = scmp.eq.s32.totalorder %s16, 1
      %p33 = por %p31, %p32
      %p34 = scmp.ne.s32.totalorder %s26, %s29
      %p35 = scmp.eq.s32.totalorder %s16, 0
      %p36 = por %p34, %p35
      %p37 = scmp.ne.s32.totalorder %s26, %s29
      %p38 = scmp.eq.s32.totalorder %s21, 1
      %p39 = por %p37, %p38
      %p40 = scmp.ne.s32.totalorder %s29, %s30
      %p41 = scmp.eq.s32.totalorder %s21, 0
      %p42 = por %p40, %p41
      %p43 = scmp.ne.s32.totalorder %s29, %s30
      %p44 = scmp.eq.s32.totalorder %s22, 1
      %p45 = por %p43, %p44
      %p47 = scmp.ne.s32.totalorder %s30, %s46
      %p48 = scmp.eq.s32.totalorder %s22, 0
      %p49 = por %p47, %p48
      %s51 = sadd.s32 %s50, 1
      %p54 = scmp.eq.s32.totalorder %s16, 1
      %p55 = scmp.ne.s32.totalorder %s50, %s52
      %p56 = scmp.eq.s32.totalorder %s16, 0
      %p57 = por %p55, %p56
      %p58 = scmp.ne.s32.totalorder %s50, %s52
      %p59 = scmp.eq.s32.totalorder %s21, 1
      %p60 = por %p58, %p59
      %p61 = scmp.ne.s32.totalorder %s52, %s53
      %p62 = scmp.eq.s32.totalorder %s21, 0
      %p63 = por %p61, %p62
      %p64 = scmp.ne.s32.totalorder %s52, %s53
      %p65 = scmp.eq.s32.totalorder %s22, 1
      %p66 = por %p64, %p65
      %p68 = scmp.ne.s32.totalorder %s53, %s67
      %p69 = scmp.eq.s32.totalorder %s22, 0
      %p70 = por %p68, %p69
      %s72 = sadd.s32 %s71, 1
      %p75 = scmp.eq.s32.totalorder %s16, 1
      %p76 = scmp.ne.s32.totalorder %s71, %s73
      %p77 = scmp.eq.s32.totalorder %s16, 0
      %p78 = por %p76, %p77
      %p79 = scmp.ne.s32.totalorder %s71, %s73
      %p80 = scmp.eq.s32.totalorder %s21, 1
      %p81 = por %p79, %p80
      %p82 = scmp.ne.s32.totalorder %s73, %s74
      %p83 = scmp.eq.s32.totalorder %s21, 0
      %p84 = por %p82, %p83
      %p85 = scmp.ne.s32.totalorder %s73, %s74
      %p86 = scmp.eq.s32.totalorder %s22, 1
      %p87 = por %p85, %p86
      %p89 = scmp.ne.s32.totalorder %s74, %s88
      %p90 = scmp.eq.s32.totalorder %s22, 0
      %p91 = por %p89, %p90
      %s92 = ssub.s32 %s16, %s23
      %p93 = scmp.eq.s32.totalorder %s92, 0
      %s95 = sadd.s32 %s94, 1
      %s96 = scalar_select %p93, %s94, %s95
      %p99 = pneg %p93
      %p100 = scmp.eq.s32.totalorder %s16, 1
      %p101 = por %p99, %p100
      %p102 = scmp.ne.s32.totalorder %s94, %s97
      %p103 = scmp.eq.s32.totalorder %s16, 0
      %p104 = por %p102, %p103
      %p105 = scmp.ne.s32.totalorder %s94, %s97
      %p106 = scmp.eq.s32.totalorder %s21, 1
      %p107 = por %p105, %p106
      %p108 = scmp.ne.s32.totalorder %s97, %s98
      %p109 = scmp.eq.s32.totalorder %s21, 0
      %p110 = por %p108, %p109
      %p111 = scmp.ne.s32.totalorder %s97, %s98
      %p112 = scmp.eq.s32.totalorder %s22, 1
      %p113 = por %p111, %p112
      %p115 = scmp.ne.s32.totalorder %s98, %s114
      %p116 = scmp.eq.s32.totalorder %s22, 0
      %p117 = por %p115, %p116
      %p118 = scmp.le.s32.totalorder 1, %s16
      %p119 = scmp.lt.s32.totalorder %s16, 3
      %p120 = pnand %p118, %p119
      %p121 = pneg %p120
      // Predicated region
      $region9: #{tpu_custom_call.1} parent=5 // pred_check
        _
      $region10: #{tpu_custom_call.1} parent=5 // pred_check_branch
        %123 = sbr.rel (%p120) target = $region12
      $region11: #{tpu_custom_call.1} parent=5 // pred_region
        %s124 = ssub.s32 %s16, 1
        // Predicated region
        $region13: #{tpu_custom_call.1} parent=11 // pred_check
          %p125 = pneg %p63
        $region14: #{tpu_custom_call.1} parent=11 // pred_check_branch
          %127 = sbr.rel (%p125) target = $region16
        $region15: #{tpu_custom_call.1} parent=11 // pred_region
          %s129 = ssub.s32 512, 512
          %130 = vsyncadd [#allocation6], %s129
          %s131 = sshll.u32 [#allocation5], 4
          %s132 = int_to_ptr.vmem [resolvable:$true] %s131
          %137 = dma.hbm_to_vmem [thread:$0]  %s1, 512, %s132, [#allocation6], 128, 128, 8
        $region16: #{tpu_custom_call.1} parent=11 // pred_fallthru
          _
        // Predicated region
        $region17: #{tpu_custom_call.1} parent=11 // pred_check
          %p138 = pneg %p84
        $region18: #{tpu_custom_call.1} parent=11 // pred_check_branch
          %140 = sbr.rel (%p138) target = $region20
        $region19: #{tpu_custom_call.1} parent=11 // pred_region
          _
        $region20: #{tpu_custom_call.1} parent=11 // pred_fallthru
          _
      $region12: #{tpu_custom_call.1} parent=5 // pred_fallthru
        _
      %p141 = scmp.lt.s32.totalorder %s16, 2
      // Predicated region
      $region21: #{tpu_custom_call.1} parent=5 // pred_check
        %p142 = pneg %p141
      $region22: #{tpu_custom_call.1} parent=5 // pred_check_branch
        %144 = sbr.rel (%p142) target = $region24
      $region23: #{tpu_custom_call.1} parent=5 // pred_region
        // Predicated region
        $region25: #{tpu_custom_call.1} parent=23 // pred_check
          %p145 = pneg %p36
        $region26: #{tpu_custom_call.1} parent=23 // pred_check_branch
          %147 = sbr.rel (%p145) target = $region28
        $region27: #{tpu_custom_call.1} parent=23 // pred_region
          %s148 = sand.u32 %s26, 1
          %s149 = scalar_lea.sflag [#allocation3], %s148
          %s150 = sand.u32 %s26, 1
          %s151 = smul.addr %s150, 8
          %s152 = scalar_lea.vmem [#allocation2], %s151
          %s154 = ssub.s32 128, 128
          %155 = vsyncadd %s149, %s154
          %s156 = smul.addr %s16, 128
          %s157 = scalar_lea.hbm %s0, %s156
          %s159 = sshll.u32 %s152, 4
          %s160 = int_to_ptr.vmem [resolvable:$true] %s159
          %162 = dma.hbm_to_vmem [thread:$0]  %s157, 128, %s160, %s149
        $region28: #{tpu_custom_call.1} parent=23 // pred_fallthru
          _
      $region24: #{tpu_custom_call.1} parent=5 // pred_fallthru
        _
      %p163 = scmp.le.s32.totalorder 1, %s16
      %p164 = scmp.lt.s32.totalorder %s16, 3
      %p165 = pnand %p163, %p164
      %p166 = pneg %p165
      // Predicated region
      $region29: #{tpu_custom_call.1} parent=5 // pred_check
        _
      $region30: #{tpu_custom_call.1} parent=5 // pred_check_branch
        %168 = sbr.rel (%p165) target = $region32
      $region31: #{tpu_custom_call.1} parent=5 // pred_region
        %s169 = ssub.s32 %s16, 1
        %s170 = sand.u32 %s29, 1
        %s171 = scalar_lea.sflag [#allocation3], %s170
        %s172 = sand.u32 %s29, 1
        %s173 = smul.addr %s172, 8
        %s174 = scalar_lea.vmem [#allocation2], %s173
        // Predicated region
        $region33: #{tpu_custom_call.1} parent=31 // pred_check
          %p175 = pneg %p42
        $region34: #{tpu_custom_call.1} parent=31 // pred_check_branch
          %177 = sbr.rel (%p175) target = $region36
        $region35: #{tpu_custom_call.1} parent=31 // pred_region
          %178 = dma.done %s171, 128
        $region36: #{tpu_custom_call.1} parent=31 // pred_fallthru
          _
        // Predicated region
        $region37: #{tpu_custom_call.1} parent=31 // pred_check
          %p179 = pneg %p63
        $region38: #{tpu_custom_call.1} parent=31 // pred_check_branch
          %181 = sbr.rel (%p179) target = $region40
        $region39: #{tpu_custom_call.1} parent=31 // pred_region
          %182 = dma.done [#allocation6], 512
        $region40: #{tpu_custom_call.1} parent=31 // pred_fallthru
          _
        %s183 = sand.u32 %s29, 1
        %s184 = scalar_lea.sflag [#allocation3], %s183
        %s185 = sand.u32 %s29, 1
        %s186 = smul.addr %s185, 8
        %s187 = scalar_lea.vmem [#allocation2], %s186
        %p188 = pneg %p42
        %p189 = pneg %p39
        %p190 = pneg %p63
        %p191 = pneg %p60
        %p192 = pneg %p84
        %p193 = pneg %p81
        %p194 = pneg %p110
        %p195 = pneg %p107
        %s196 = sand.u32 %s97, 1
        %s197 = scalar_lea.sflag [#allocation4], %s196
        %s198 = sand.u32 %s97, 1
        %s199 = smul.addr %s198, 8
        %s200 = scalar_lea.vmem [#allocation7], %s199
        %v201 = vld [vmem:[%s2] sm:$0x7]
        %v202 = vld [vmem:[%s174] sm:$0xff]
        %v203 = vld [vmem:[#allocation5] sm:$0xff]
        %v204 = vld [vmem:[#allocation5 + $0x8] sm:$0xff]
        %v205 = vld [vmem:[#allocation5 + $0x10] sm:$0xff]
        %v206 = vld [vmem:[#allocation5 + $0x18] sm:$0xff]
        %v207 = vlaneseq
        %v208 = vshrl.u32 %v207, 7
        %v209 = vsub.s32 0, %v208
        %v210 = vrot.slane %v201, %v209
        %vm211 = vcmask 261120
        %v213 = vsel %vm211, %v202, 0
        %215 = vmatprep.subr.mxu0 0.0
        %216 = vmatpush1.msra.mxu0 %v203
        %217 = vmatprep.subr.mxu0 0.0
        %218 = vmatpush1.msra.mxu0 %v204
        %219 = vmatprep.subr.mxu0 0.0
        %220 = vmatpush1.msra.mxu0 %v205
        %221 = vmatprep.subr.mxu0 0.0
        %222 = vmatpush1.msra.mxu0 %v206
        %223 = vmatprep.subr.mxu0 0.0
        %224 = vmatpush1.msra.mxu0 0.0
        %225 = vmatprep.subr.mxu0 0.0
        %226 = vmatpush1.msra.mxu0 0.0
        %227 = vmatprep.subr.mxu0 0.0
        %228 = vmatpush1.msra.mxu0 0.0
        %229 = vmatprep.subr.mxu0 0.0
        %230 = vmatpush1.msra.mxu0 0.0
        %231 = vmatprep.subr.mxu0 0.0
        %232 = vmatpush1.msra.mxu0 0.0
        %233 = vmatprep.subr.mxu0 0.0
        %234 = vmatpush1.msra.mxu0 0.0
        %235 = vmatprep.subr.mxu0 0.0
        %236 = vmatpush1.msra.mxu0 0.0
        %237 = vmatprep.subr.mxu0 0.0
        %238 = vmatpush1.msra.mxu0 0.0
        %239 = vmatprep.subr.mxu0 0.0
        %240 = vmatpush1.msra.mxu0 0.0
        %241 = vmatprep.subr.mxu0 0.0
        %242 = vmatpush1.msra.mxu0 0.0
        %243 = vmatprep.subr.mxu0 0.0
        %244 = vmatpush1.msra.mxu0 0.0
        %245 = vmatprep.subr.mxu0 0.0
        %246 = vmatpush1.msra.mxu0 0.0
        %247 = vmatprep.subr.mxu0 0.0
        %248 = vmatpush1.msra.mxu0 0.0
        %249 = vmatprep.subr.mxu0 0.0
        %250 = vmatpush1.msra.mxu0 0.0
        %251 = vmatprep.subr.mxu0 0.0
        %252 = vmatpush1.msra.mxu0 0.0
        %253 = vmatprep.subr.mxu0 0.0
        %254 = vmatpush1.msra.mxu0 0.0
        %255 = vmatprep.subr.mxu0 0.0
        %256 = vmatpush1.msra.mxu0 0.0
        %257 = vmatprep.subr.mxu0 0.0
        %258 = vmatpush1.msra.mxu0 0.0
        %259 = vmatprep.subr.mxu0 0.0
        %260 = vmatpush1.msra.mxu0 0.0
        %261 = vmatprep.subr.mxu0 0.0
        %262 = vmatpush1.msra.mxu0 0.0
        %263 = vmatprep.subr.mxu0 0.0
        %264 = vmatpush1.msra.mxu0 0.0
        %265 = vmatprep.subr.mxu0 0.0
        %266 = vmatpush1.msra.mxu0 0.0
        %267 = vmatprep.subr.mxu0 0.0
        %268 = vmatpush1.msra.mxu0 0.0
        %269 = vmatprep.subr.mxu0 0.0
        %270 = vmatpush1.msra.mxu0 0.0
        %271 = vmatprep.subr.mxu0 0.0
        %272 = vmatpush1.msra.mxu0 0.0
        %273 = vmatprep.subr.mxu0 0.0
        %274 = vmatpush1.msra.mxu0 0.0
        %275 = vmatprep.subr.mxu0 0.0
        %276 = vmatpush1.msra.mxu0 0.0
        %277 = vmatprep.subr.mxu0 0.0
        %278 = vmatpush1.msra.mxu0 0.0
        %279 = vmatprep.mubr.f32.mxu0 0.0
        %280 = vmatmul.mubr.f32.gmra.mrb[0].mxu0 %v213
        %v281 = vpop.f32.mrb[0].mxu0
        %v282 = vadd.f32 %v210, %v281
        %v283 = vpop.f32.mrb[0].mxu0
        %284 = vdwg.mxu0
        %vm285 = vcmask 523264
        %v286 = vsel %vm285, %v282, 0.0
        %287 = vadd.xlane.f32.xlu0 %v286
        %v288 = vpop.xlane.xlu0 %287
        %v289 = vmul.f32 %v288, 0.015625
        %v290 = vsub.f32 %v282, %v289
        %v291 = vmul.f32 %v290, %v290
        %v292 = vsel %vm285, %v291, 0.0
        %293 = vadd.xlane.f32.xlu0 %v292
        %v294 = vpop.xlane.xlu0 %293
        %v295 = vmul.f32 %v294, 0.015625
        %v296 = vadd.f32 %v295, 1e-12
        %v297 = vrsqrt.pop %v296
        %v298 = vlaneseq
        %v299 = vshrl.u32 %v298, 7
        %v300 = vsub.s32 1, %v299
        %v301 = vrot.slane %v201, %v300
        %v302 = vmul.f32 %v297, %v301
        %v303 = vmul.f32 %v290, %v302
        %v304 = vlaneseq
        %v305 = vshrl.u32 %v304, 7
        %v306 = vsub.s32 2, %v305
        %v307 = vrot.slane %v201, %v306
        %v308 = vadd.f32 %v303, %v307
        %309 = vst.msk [vmem:[%s200] sm:$0xff] %vm285, %v308
        %s310 = sand.u32 %s97, 1
        %s311 = scalar_lea.sflag [#allocation4], %s310
        %s312 = sand.u32 %s97, 1
        %s313 = smul.addr %s312, 8
        %s314 = scalar_lea.vmem [#allocation7], %s313
        // Predicated region
        $region41: #{tpu_custom_call.1} parent=31 // pred_check
          %p315 = pneg %p107
        $region42: #{tpu_custom_call.1} parent=31 // pred_check_branch
          %317 = sbr.rel (%p315) target = $region44
        $region43: #{tpu_custom_call.1} parent=31 // pred_region
          %s319 = ssub.s32 128, 128
          %320 = vsyncadd %s311, %s319
          %s321 = smul.addr %s21, 128
          %s322 = scalar_lea.hbm %s3, %s321
          %s324 = sshll.u32 %s314, 4
          %s325 = int_to_ptr.vmem [resolvable:$true] %s324
          %327 = dma.vmem_to_hbm [thread:$0]  %s325, 128, %s322, %s311
        $region44: #{tpu_custom_call.1} parent=31 // pred_fallthru
          _
      $region32: #{tpu_custom_call.1} parent=5 // pred_fallthru
        _
      %p328 = scmp.le.s32.totalorder 2, %s16
      // Predicated region
      $region45: #{tpu_custom_call.1} parent=5 // pred_check
        %p329 = pneg %p328
      $region46: #{tpu_custom_call.1} parent=5 // pred_check_branch
        %331 = sbr.rel (%p329) target = $region48
      $region47: #{tpu_custom_call.1} parent=5 // pred_region
        %s332 = ssub.s32 %s16, 2
        // Predicated region
        $region49: #{tpu_custom_call.1} parent=47 // pred_check
          %p333 = pneg %p113
        $region50: #{tpu_custom_call.1} parent=47 // pred_check_branch
          %335 = sbr.rel (%p333) target = $region52
        $region51: #{tpu_custom_call.1} parent=47 // pred_region
          %s336 = sand.u32 %s98, 1
          %s337 = scalar_lea.sflag [#allocation4], %s336
          %s338 = sand.u32 %s98, 1
          %s339 = smul.addr %s338, 8
          %s340 = scalar_lea.vmem [#allocation7], %s339
          %341 = dma.done %s337, 128
        $region52: #{tpu_custom_call.1} parent=47 // pred_fallthru
          _
      $region48: #{tpu_custom_call.1} parent=5 // pred_fallthru
        _
    $region6: #{tpu_custom_call.1} parent=1 // loop_footer
      %s20 = sadd.s32 1, %s16
    $region7: #{tpu_custom_call.1} parent=1 // loop_footer_branch
      %15 = sbr.rel target = $region3
    $region8: #{tpu_custom_call.1} parent=1 // loop_exit
      _
    %342 = vsyncpa [#allocation3], 1
    %s343 = scalar_lea.sflag [#allocation3], 1
    %344 = vsyncpa %s343, 1
    %345 = vsyncpa [#allocation6], 1
    %346 = vsyncpa [#allocation4], 1
    %s347 = scalar_lea.sflag [#allocation4], 1
    %348 = vsyncpa %s347, 1

</llo_original>
